<compile_context>
chip_gen: v5e
topology: v5e:2x2
jax: 0.10.0
libtpu: 0.0.40
codegen_flags: <defaults>
</compile_context>

<pallas_src>
import jax
import jax.numpy as jnp
from jax.experimental import pallas as pl
from jax.experimental.pallas import tpu as pltpu

# ----------------------------- model dims -----------------------------------
B = 2           # batch
S = 8           # sequence length
D = 32          # hidden size
LN_EPS = 1e-12  # BERT LayerNorm eps


def self_output_kernel(h_ref, x_ref, w_ref, p_ref, o_ref):
    """y = LayerNorm(h @ W + b + x).

    h_ref, x_ref : (B*S, D) activations (hidden_states, residual input_tensor)
    w_ref        : (D, D) dense weight stored (in, out)
    p_ref        : (3, D) packed params: row 0 = bias, 1 = gamma, 2 = beta
    o_ref        : (B*S, D) output
    """
    h = h_ref[...].astype(jnp.float32)
    x = x_ref[...].astype(jnp.float32)

    bias = p_ref[0:1, :]    # (1, D)
    gamma = p_ref[1:2, :]   # (1, D)
    beta = p_ref[2:3, :]    # (1, D)

    # dense + bias + residual (MXU matmul, f32 accumulate)
    y = jnp.dot(h, w_ref[...], preferred_element_type=jnp.float32) + bias + x

    # LayerNorm over the last axis; 1/D is a compile-time constant so the
    # mean/variance use multiplies, and rsqrt goes to the EUP.
    inv_d = jnp.float32(1.0 / D)
    mu = jnp.sum(y, axis=-1, keepdims=True) * inv_d
    yc = y - mu
    var = jnp.sum(yc * yc, axis=-1, keepdims=True) * inv_d
    out = yc * jax.lax.rsqrt(var + LN_EPS) * gamma + beta

    o_ref[...] = out.astype(o_ref.dtype)


def quant_bert_self_output(hidden_states, input_tensor, weight, packed_params):
    """hidden_states, input_tensor: (B, S, D); weight: (D, D) as (in, out);
    packed_params: (3, D) = [bias; gamma; beta]."""
    b, s, d = hidden_states.shape
    h2 = hidden_states.reshape(b * s, d)
    x2 = input_tensor.reshape(b * s, d)

    vmem = pl.BlockSpec(memory_space=pltpu.MemorySpace.VMEM)
    out = pl.pallas_call(
        self_output_kernel,
        out_shape=jax.ShapeDtypeStruct((b * s, d), jnp.float32),
        in_specs=[vmem, vmem, vmem, vmem],
        out_specs=vmem,
        compiler_params=pltpu.CompilerParams(
            dimension_semantics=()),
    )(h2, x2, weight, packed_params)

    return out.reshape(b, s, d)


def reference_forward(hidden_states, input_tensor, weight, packed_params):
    """Pure-JAX reference of the PyTorch forward (quant disabled)."""
    bias = packed_params[0:1, :]
    gamma = packed_params[1:2, :]
    beta = packed_params[2:3, :]
    y = hidden_states @ weight + bias + input_tensor
    mu = y.mean(-1, keepdims=True)
    var = ((y - mu) ** 2).mean(-1, keepdims=True)
    return (y - mu) / jnp.sqrt(var + LN_EPS) * gamma + beta


if __name__ == "__main__":
    key = jax.random.PRNGKey(0)
    kh, kx, kw, kb, kg, kbt = jax.random.split(key, 6)

    hidden_states = jax.random.normal(kh, (B, S, D), jnp.float32)
    input_tensor = jax.random.normal(kx, (B, S, D), jnp.float32)

    weight = 0.05 * jax.random.normal(kw, (D, D), jnp.float32)     # (in, out)
    bias = 0.05 * jax.random.normal(kb, (1, D), jnp.float32)
    gamma = 1.0 + 0.1 * jax.random.normal(kg, (1, D), jnp.float32)
    beta = 0.1 * jax.random.normal(kbt, (1, D), jnp.float32)

    packed_params = jnp.concatenate([bias, gamma, beta], axis=0)   # (3, D)

    out = quant_bert_self_output(hidden_states, input_tensor, weight,
                                 packed_params)
    out = jax.block_until_ready(out)

    ref = reference_forward(hidden_states, input_tensor, weight, packed_params)
    assert out.shape == (B, S, D)
    assert jnp.allclose(out, ref, atol=1e-4, rtol=1e-4), (
        float(jnp.max(jnp.abs(out - ref))))

    print("KERNEL_OK")
</pallas_src>

<mosaic_0001>
module attributes {stable_mosaic.version = 11 : i64} {
  func.func @self_output_kernel(%arg0: memref<16x32xf32, #tpu.memory_space<vmem>>, %arg1: memref<16x32xf32, #tpu.memory_space<vmem>>, %arg2: memref<32x32xf32, #tpu.memory_space<vmem>>, %arg3: memref<3x32xf32, #tpu.memory_space<vmem>>, %arg4: memref<16x32xf32, #tpu.memory_space<vmem>>) attributes {dimension_semantics = [], scalar_prefetch = 0 : i64, scratch_operands = 0 : i64, tpu.core_type = #tpu.core_type<tc>} {
    %c0 = arith.constant 0 : index
    %c0_0 = arith.constant 0 : index
    %0 = vector.load %arg0[%c0, %c0_0] : memref<16x32xf32, #tpu.memory_space<vmem>>, vector<16x32xf32>
    %c0_1 = arith.constant 0 : index
    %c0_2 = arith.constant 0 : index
    %1 = vector.load %arg1[%c0_1, %c0_2] : memref<16x32xf32, #tpu.memory_space<vmem>>, vector<16x32xf32>
    %c0_3 = arith.constant 0 : index
    %c0_4 = arith.constant 0 : index
    %2 = vector.load %arg3[%c0_3, %c0_4] : memref<3x32xf32, #tpu.memory_space<vmem>>, vector<1x32xf32>
    %c1 = arith.constant 1 : index
    %c0_5 = arith.constant 0 : index
    %3 = vector.load %arg3[%c1, %c0_5] : memref<3x32xf32, #tpu.memory_space<vmem>>, vector<1x32xf32>
    %c2 = arith.constant 2 : index
    %c0_6 = arith.constant 0 : index
    %4 = vector.load %arg3[%c2, %c0_6] : memref<3x32xf32, #tpu.memory_space<vmem>>, vector<1x32xf32>
    %c0_7 = arith.constant 0 : index
    %c0_8 = arith.constant 0 : index
    %5 = vector.load %arg2[%c0_7, %c0_8] : memref<32x32xf32, #tpu.memory_space<vmem>>, vector<32x32xf32>
    %cst = arith.constant dense<0.000000e+00> : vector<16x32xf32>
    %6 = tpu.matmul %0, %5, %cst {dimension_numbers = #tpu.dot_dimension_numbers<[1], [0], [0], [1], [0, 0, 1, 1], [], []>} : vector<16x32xf32>, vector<32x32xf32>, vector<16x32xf32> -> vector<16x32xf32>
    %7 = vector.broadcast %2 : vector<1x32xf32> to vector<16x32xf32>
    %8 = arith.addf %6, %7 : vector<16x32xf32>
    %9 = arith.addf %8, %1 : vector<16x32xf32>
    %cst_9 = arith.constant dense<0.000000e+00> : vector<16xf32>
    %10 = vector.multi_reduction <add>, %9, %cst_9 [1] : vector<16x32xf32> to vector<16xf32>
    %11 = vector.shape_cast %10 : vector<16xf32> to vector<16x1xf32>
    %cst_10 = arith.constant 3.125000e-02 : f32
    %12 = vector.broadcast %cst_10 : f32 to vector<16x1xf32>
    %13 = arith.mulf %11, %12 : vector<16x1xf32>
    %14 = vector.broadcast %13 : vector<16x1xf32> to vector<16x32xf32>
    %15 = arith.subf %9, %14 : vector<16x32xf32>
    %16 = arith.mulf %15, %15 : vector<16x32xf32>
    %cst_11 = arith.constant dense<0.000000e+00> : vector<16xf32>
    %17 = vector.multi_reduction <add>, %16, %cst_11 [1] : vector<16x32xf32> to vector<16xf32>
    %18 = vector.shape_cast %17 : vector<16xf32> to vector<16x1xf32>
    %cst_12 = arith.constant 3.125000e-02 : f32
    %19 = vector.broadcast %cst_12 : f32 to vector<16x1xf32>
    %20 = arith.mulf %18, %19 : vector<16x1xf32>
    %cst_13 = arith.constant 9.99999996E-13 : f32
    %21 = vector.broadcast %cst_13 : f32 to vector<16x1xf32>
    %22 = arith.addf %20, %21 : vector<16x1xf32>
    %23 = math.rsqrt %22 : vector<16x1xf32>
    %24 = vector.broadcast %23 : vector<16x1xf32> to vector<16x32xf32>
    %25 = arith.mulf %15, %24 : vector<16x32xf32>
    %26 = vector.broadcast %3 : vector<1x32xf32> to vector<16x32xf32>
    %27 = arith.mulf %25, %26 : vector<16x32xf32>
    %28 = vector.broadcast %4 : vector<1x32xf32> to vector<16x32xf32>
    %29 = arith.addf %27, %28 : vector<16x32xf32>
    %c0_14 = arith.constant 0 : index
    %c0_15 = arith.constant 0 : index
    %30 = vector.load %arg4[%c0_14, %c0_15] : memref<16x32xf32, #tpu.memory_space<vmem>>, vector<16x32xf32>
    tpu.vector_store %arg4[%c0_14, %c0_15], %29 {strides = array<i32>} : memref<16x32xf32, #tpu.memory_space<vmem>>, vector<16x32xf32>,
    return
  }
}

</mosaic_0001>

<llo_original>
// kernel: tpu_custom_call.1
$region0: #{tpu_custom_call.1}
  #allocation0 [shape = 'u32[]', space=smem, size = 0x4, offset = 0x4, fixed_abs, tag = 'smem constant byte address 0x4 - core index']
  #allocation1 [shape = 'u32[72,128]{1,0:T(1,128)}', space=vmem, size = 0x9000, scoped, tag = 'internal scratch']
  %s0 = inlined_call_operand.hbm [shape: f32[16,32], index: 0, kind: input, shape index: {}]
  %s1 = inlined_call_operand.hbm [shape: f32[16,32], index: 1, kind: input, shape index: {}]
  %s2 = inlined_call_operand.hbm [shape: f32[32,32], index: 2, kind: input, shape index: {}]
  %s3 = inlined_call_operand.hbm [shape: f32[3,32], index: 3, kind: input, shape index: {}]
  %s4 = inlined_call_operand.hbm [shape: f32[16,32], index: 4, kind: output, shape index: {}]
  %s5 = sld [smem:[#allocation0]]
  $region42: #{tpu_custom_call.1} parent=0
    _
  %s7 = ssub.s32 1, %s5
  %s8 = scalar_select 0, %s7, %s5
  $region1: #{tpu_custom_call.1} parent=0
    #allocation2 [shape = 'u8[8192]{0}', space=vmem, size = 0x2000, scoped, tag = 'input window, operand 0, single buffered']
    #allocation3 [shape = 's32[1]{0}', space=sflag, size = 0x4, scoped, tag = 'scoped memory for tpu_custom_call.1']
    #allocation4 [shape = 's32[1]{0}', space=sflag, size = 0x4, scoped, tag = 'scoped memory for tpu_custom_call.1']
    #allocation5 [shape = 'u8[8192]{0}', space=vmem, size = 0x2000, scoped, tag = 'input window, operand 1, single buffered']
    #allocation6 [shape = 's32[1]{0}', space=sflag, size = 0x4, scoped, tag = 'scoped memory for tpu_custom_call.1']
    #allocation7 [shape = 'u8[16384]{0}', space=vmem, size = 0x4000, scoped, tag = 'input window, operand 2, single buffered']
    #allocation8 [shape = 'u8[2048]{0}', space=vmem, size = 0x800, scoped, tag = 'input window, operand 3, single buffered']
    #allocation9 [shape = 's32[1]{0}', space=sflag, size = 0x4, scoped, tag = 'scoped memory for tpu_custom_call.1']
    #allocation10 [shape = 'u8[8192]{0}', space=vmem, size = 0x2000, scoped, tag = 'output window, operand 0, single buffered']
    %9 = vsyncpa [#allocation3], 0
    %10 = vsyncpa [#allocation6], 0
    %11 = vsyncpa [#allocation9], 0
    %12 = vsyncpa [#allocation4], 0
    // Predicated region
    $region2: #{tpu_custom_call.1} parent=1 // pred_check
      _
    $region3: #{tpu_custom_call.1} parent=1 // pred_check_branch
      %14 = sbr.rel (0) target = $region5
    $region4: #{tpu_custom_call.1} parent=1 // pred_region
      %16 = vsyncadd [#allocation3], 0
      %s17 = sshll.u32 %s0, 4
      %s18 = int_to_ptr.hbm [resolvable:$true] %s17
      %s19 = sshll.u32 [#allocation2], 4
      %s20 = int_to_ptr.vmem [resolvable:$true] %s19
      %25 = dma.hbm_to_vmem [thread:$0]  %s18, 256, %s20, [#allocation3], 128, 128, 8
    $region5: #{tpu_custom_call.1} parent=1 // pred_fallthru
      _
    // Predicated region
    $region6: #{tpu_custom_call.1} parent=1 // pred_check
      _
    $region7: #{tpu_custom_call.1} parent=1 // pred_check_branch
      %27 = sbr.rel (0) target = $region9
    $region8: #{tpu_custom_call.1} parent=1 // pred_region
      %29 = vsyncadd [#allocation6], 0
      %s30 = sshll.u32 %s1, 4
      %s31 = int_to_ptr.hbm [resolvable:$true] %s30
      %s32 = sshll.u32 [#allocation5], 4
      %s33 = int_to_ptr.vmem [resolvable:$true] %s32
      %38 = dma.hbm_to_vmem [thread:$0]  %s31, 256, %s33, [#allocation6], 128, 128, 8
    $region9: #{tpu_custom_call.1} parent=1 // pred_fallthru
      _
    // Predicated region
    $region10: #{tpu_custom_call.1} parent=1 // pred_check
      _
    $region11: #{tpu_custom_call.1} parent=1 // pred_check_branch
      %40 = sbr.rel (0) target = $region13
    $region12: #{tpu_custom_call.1} parent=1 // pred_region
      %42 = vsyncadd [#allocation6], 0
      %s43 = sshll.u32 %s2, 4
      %s44 = int_to_ptr.hbm [resolvable:$true] %s43
      %s45 = sshll.u32 [#allocation7], 4
      %s46 = int_to_ptr.vmem [resolvable:$true] %s45
      %51 = dma.hbm_to_vmem [thread:$0]  %s44, 512, %s46, [#allocation6], 128, 128, 8
    $region13: #{tpu_custom_call.1} parent=1 // pred_fallthru
      _
    // Predicated region
    $region14: #{tpu_custom_call.1} parent=1 // pred_check
      _
    $region15: #{tpu_custom_call.1} parent=1 // pred_check_branch
      %53 = sbr.rel (0) target = $region17
    $region16: #{tpu_custom_call.1} parent=1 // pred_region
      %55 = vsyncadd [#allocation9], 0
      %s57 = sshll.u32 %s3, 4
      %s58 = int_to_ptr.hbm [resolvable:$true] %s57
      %s59 = sshll.u32 [#allocation8], 4
      %s60 = int_to_ptr.vmem [resolvable:$true] %s59
      %62 = dma.hbm_to_vmem [thread:$0]  %s58, 64, %s60, [#allocation9]
    $region17: #{tpu_custom_call.1} parent=1 // pred_fallthru
      _
    // Predicated region
    $region18: #{tpu_custom_call.1} parent=1 // pred_check
      _
    $region19: #{tpu_custom_call.1} parent=1 // pred_check_branch
      %64 = sbr.rel (0) target = $region21
    $region20: #{tpu_custom_call.1} parent=1 // pred_region
      %66 = dma.done [#allocation3], 256
    $region21: #{tpu_custom_call.1} parent=1 // pred_fallthru
      _
    // Predicated region
    $region22: #{tpu_custom_call.1} parent=1 // pred_check
      _
    $region23: #{tpu_custom_call.1} parent=1 // pred_check_branch
      %68 = sbr.rel (0) target = $region25
    $region24: #{tpu_custom_call.1} parent=1 // pred_region
      %70 = dma.done [#allocation6], 256
    $region25: #{tpu_custom_call.1} parent=1 // pred_fallthru
      _
    // Predicated region
    $region26: #{tpu_custom_call.1} parent=1 // pred_check
      _
    $region27: #{tpu_custom_call.1} parent=1 // pred_check_branch
      %72 = sbr.rel (0) target = $region29
    $region28: #{tpu_custom_call.1} parent=1 // pred_region
      %74 = dma.done [#allocation6], 512
    $region29: #{tpu_custom_call.1} parent=1 // pred_fallthru
      _
    // Predicated region
    $region30: #{tpu_custom_call.1} parent=1 // pred_check
      _
    $region31: #{tpu_custom_call.1} parent=1 // pred_check_branch
      %76 = sbr.rel (0) target = $region33
    $region32: #{tpu_custom_call.1} parent=1 // pred_region
      %78 = dma.done [#allocation9], 64
    $region33: #{tpu_custom_call.1} parent=1 // pred_fallthru
      _
    %v79 = vld [vmem:[#allocation2] sm:$0xff]
    %v80 = vld [vmem:[#allocation2 + $0x8] sm:$0xff]
    %v81 = vld [vmem:[#allocation5] sm:$0xff]
    %v82 = vld [vmem:[#allocation5 + $0x8] sm:$0xff]
    %v83 = vld [vmem:[#allocation8] sm:$0x1]
    %v84 = vld [vmem:[#allocation8 + $0x1] sm:$0x1]
    %v85 = vld [vmem:[#allocation8 + $0x2] sm:$0x1]
    %v86 = vld [vmem:[#allocation7] sm:$0xff]
    %v87 = vld [vmem:[#allocation7 + $0x8] sm:$0xff]
    %v88 = vld [vmem:[#allocation7 + $0x10] sm:$0xff]
    %v89 = vld [vmem:[#allocation7 + $0x18] sm:$0xff]
    %v90 = vperm.slane %v83, 0
    %vm91 = vcmask 261120
    %v93 = vsel %vm91, %v79, 0
    %v96 = vsel %vm91, %v80, 0
    %98 = vmatpush.msra.mxu0 0.0
    %99 = vmatpush.msra.mxu0 0.0
    %100 = vmatpush.msra.mxu0 0.0
    %101 = vmatpush.msra.mxu0 0.0
    %102 = vmatpush.msra.mxu0 0.0
    %103 = vmatpush.msra.mxu0 0.0
    %104 = vmatpush.msra.mxu0 0.0
    %105 = vmatpush.msra.mxu0 0.0
    %106 = vmatpush.msra.mxu0 0.0
    %107 = vmatpush.msra.mxu0 0.0
    %108 = vmatpush.msra.mxu0 0.0
    %109 = vmatpush.msra.mxu0 0.0
    %110 = vmatpush.msra.mxu0 %v89
    %111 = vmatpush.msra.mxu0 %v88
    %112 = vmatpush.msra.mxu0 %v87
    %113 = vmatpush.msra.mxu0 %v86
    %114 = vmatmul.f32.gmra.mxu0 %v93
    %v115 = vpop.f32.mrf.mxu0
    %v116 = vadd.f32 %v90, %v115
    %117 = vmatmul.f32.gmra.mxu0 %v96
    %v118 = vpop.f32.mrf.mxu0
    %v119 = vadd.f32 %v90, %v118
    %120 = vdwg.mxu0
    %v121 = vadd.f32 %v116, %v81
    %v122 = vadd.f32 %v119, %v82
    %v123 = vsel %vm91, %v121, 0.0
    %124 = vadd.xlane.f32.xlu0 %v123
    %v125 = vpop.xlane.xlu0 %124
    %v126 = vsel %vm91, %v122, 0.0
    %127 = vadd.xlane.f32.xlu0 %v126
    %v128 = vpop.xlane.xlu0 %127
    %v129 = vmul.f32 %v125, 0.03125
    %v130 = vmul.f32 %v128, 0.03125
    %v131 = vsub.f32 %v121, %v129
    %v132 = vsub.f32 %v122, %v130
    %v133 = vmul.f32 %v131, %v131
    %v134 = vmul.f32 %v132, %v132
    %v135 = vsel %vm91, %v133, 0.0
    %136 = vadd.xlane.f32.xlu0 %v135
    %v137 = vpop.xlane.xlu0 %136
    %v138 = vsel %vm91, %v134, 0.0
    %139 = vadd.xlane.f32.xlu0 %v138
    %v140 = vpop.xlane.xlu0 %139
    %v141 = vmul.f32 %v137, 0.03125
    %v142 = vmul.f32 %v140, 0.03125
    %v143 = vadd.f32 %v141, 1e-12
    %v144 = vadd.f32 %v142, 1e-12
    %v145 = vrsqrt.pop %v143
    %v146 = vmul.f32 %v145, %v143
    %v147 = vmul.f32 %v146, %v145
    %v148 = vmul.f32 0.5, %v147
    %v149 = vsub.f32 1.5, %v148
    %v150 = vmul.f32 %v145, %v149
    %vm151 = vweird.f32 %v143
    %vm152 = vweird.f32 %v145
    %vm153 = vmor %vm151, %vm152
    %v154 = vsel %vm153, %v145, %v150
    %v155 = vrsqrt.pop %v144
    %v156 = vmul.f32 %v155, %v144
    %v157 = vmul.f32 %v156, %v155
    %v158 = vmul.f32 0.5, %v157
    %v159 = vsub.f32 1.5, %v158
    %v160 = vmul.f32 %v155, %v159
    %vm161 = vweird.f32 %v144
    %vm162 = vweird.f32 %v155
    %vm163 = vmor %vm161, %vm162
    %v164 = vsel %vm163, %v155, %v160
    %v165 = vmul.f32 %v131, %v154
    %v166 = vmul.f32 %v132, %v164
    %v167 = vperm.slane %v84, 0
    %v168 = vmul.f32 %v165, %v167
    %v169 = vmul.f32 %v166, %v167
    %v170 = vperm.slane %v85, 0
    %v171 = vadd.f32 %v168, %v170
    %v172 = vadd.f32 %v169, %v170
    %173 = vst.msk [vmem:[#allocation10] sm:$0xff] %vm91, %v171
    %174 = vst.msk [vmem:[#allocation10 + $0x8] sm:$0xff] %vm91, %v172
    // Predicated region
    $region34: #{tpu_custom_call.1} parent=1 // pred_check
      _
    $region35: #{tpu_custom_call.1} parent=1 // pred_check_branch
      %176 = sbr.rel (0) target = $region37
    $region36: #{tpu_custom_call.1} parent=1 // pred_region
      %178 = vsyncadd [#allocation4], 0
      %s179 = sshll.u32 [#allocation10], 4
      %s180 = int_to_ptr.vmem [resolvable:$true] %s179
      %s181 = sshll.u32 %s4, 4
      %s182 = int_to_ptr.hbm [resolvable:$true] %s181
      %187 = dma.vmem_to_hbm [thread:$0]  %s180, 256, %s182, [#allocation4], 128, 128, 8
    $region37: #{tpu_custom_call.1} parent=1 // pred_fallthru
      _
    // Predicated region
    $region38: #{tpu_custom_call.1} parent=1 // pred_check
      _
    $region39: #{tpu_custom_call.1} parent=1 // pred_check_branch
      %189 = sbr.rel (0) target = $region41
    $region40: #{tpu_custom_call.1} parent=1 // pred_region
      %191 = dma.done [#allocation4], 256
    $region41: #{tpu_custom_call.1} parent=1 // pred_fallthru
      _
    %192 = vsyncpa [#allocation3], 1
    %193 = vsyncpa [#allocation6], 1
    %194 = vsyncpa [#allocation9], 1
    %195 = vsyncpa [#allocation4], 1

</llo_original>
